<compile_context>
chip_gen: v5e
topology: v5e:2x2
jax: 0.10.0
libtpu: 0.0.40
codegen_flags: <defaults>
</compile_context>

<pallas_src>
import jax
import jax.numpy as jnp
from jax import lax
from jax.experimental import pallas as pl
from jax.experimental.pallas import tpu as pltpu


LANES = 128
SUBLANES = 8
MAX_BLOCK_ROWS = 1024        # (1024, 128) f32 = 512 KiB per block per input
NUM_CORE_SPLITS = 2          # leading "parallel" axis; shards across v7x's 2 TCs


def _make_l1_kernel(rows, block_rows, blocks_per_core, shift, needs_mask):
    """Builds the per-(core, step) kernel. All closure args are Python ints/bools."""

    def kernel(x_ref, y_ref, o_ref, acc_ref):
        c = pl.program_id(0)   # core-split index
        i = pl.program_id(1)   # block index within this core's range

        @pl.when(i == 0)
        def _():
            acc_ref[...] = jnp.zeros_like(acc_ref)

        diff = jnp.abs(x_ref[...].astype(jnp.float32)
                       - y_ref[...].astype(jnp.float32))

        if needs_mask:
            # Global row index of each element of this block.
            row0 = (c * shift + i) * block_rows
            g = row0 + lax.broadcasted_iota(jnp.int32, (block_rows, LANES), 0)
            # Rows owned by this core (disjoint cover of [0, rows)).
            own_lo = c * blocks_per_core * block_rows
            own_hi = jnp.minimum(rows, (c + 1) * blocks_per_core * block_rows)
            diff = jnp.where((g >= own_lo) & (g < own_hi), diff, 0.0)

        # Fold the block into an (8, 128) vector accumulator: pure VPU vreg
        # adds, no per-step cross-lane reduction.
        acc_ref[...] += diff.reshape(-1, SUBLANES, LANES).sum(axis=0)

        @pl.when(i == blocks_per_core - 1)
        def _():
            o_ref[0] = acc_ref[...]

    return kernel


def _l1_mean(x: jax.Array, y: jax.Array) -> jax.Array:
    """mean(|x - y|) over all elements, bulk computed with a Pallas reduction."""
    assert x.shape == y.shape, (x.shape, y.shape)
    n = x.size

    xf = x.reshape(-1)   # contiguous reshape: free
    yf = y.reshape(-1)

    chunk = SUBLANES * LANES                  # 1024 elements
    n_main = (n // chunk) * chunk             # largest (8,128)-aligned prefix
    rows = n_main // LANES                    # multiple of 8

    total = jnp.float32(0.0)

    if n_main < n:
        # Ragged tail (< 1024 elements): plain JAX, negligible HBM traffic.
        total = total + jnp.sum(
            jnp.abs(xf[n_main:].astype(jnp.float32)
                    - yf[n_main:].astype(jnp.float32)))

    if rows > 0:
        # Fast path: when n is a multiple of 1024 the slice below is the
        # identity (no extra HBM copy); otherwise XLA materializes the prefix
        # once (only for ragged sizes).
        x2 = (xf if n_main == n else xf[:n_main]).reshape(rows, LANES)
        y2 = (yf if n_main == n else yf[:n_main]).reshape(rows, LANES)

        block_rows = min(MAX_BLOCK_ROWS, rows)          # multiple of 8
        n_blocks = pl.cdiv(rows, block_rows)

        # Only split across cores when there is enough work to amortize the
        # (at most one) redundantly-loaded overlap block on single-TC chips.
        num_splits = NUM_CORE_SPLITS if n_blocks >= 4 * NUM_CORE_SPLITS else 1
        blocks_per_core = pl.cdiv(n_blocks, num_splits)
        shift = n_blocks - blocks_per_core              # core c starts at block c*shift
        needs_mask = (rows % block_rows != 0) or (n_blocks % num_splits != 0)

        kernel = _make_l1_kernel(rows, block_rows, blocks_per_core, shift,
                                 needs_mask)

        def in_map(c, i):
            return (c * shift + i, 0)

        bytes_in = n_main * (x2.dtype.itemsize + y2.dtype.itemsize)
        out_bytes = num_splits * SUBLANES * LANES * 4

        per_core = pl.pallas_call(
            kernel,
            out_shape=jax.ShapeDtypeStruct((num_splits, SUBLANES, LANES),
                                           jnp.float32),
            grid_spec=pltpu.PrefetchScalarGridSpec(
                num_scalar_prefetch=0,
                grid=(num_splits, blocks_per_core),
                in_specs=[
                    pl.BlockSpec((block_rows, LANES), in_map),
                    pl.BlockSpec((block_rows, LANES), in_map),
                ],
                out_specs=pl.BlockSpec((1, SUBLANES, LANES),
                                       lambda c, i: (c, 0, 0)),
                scratch_shapes=[pltpu.VMEM((SUBLANES, LANES), jnp.float32)],
            ),
            compiler_params=pltpu.CompilerParams(
                dimension_semantics=("parallel", "arbitrary")),
            cost_estimate=pl.CostEstimate(
                flops=3 * n_main,
                transcendentals=0,
                bytes_accessed=bytes_in + out_bytes),
        )(x2, y2)

        total = total + jnp.sum(per_core)

    return total / jnp.float32(n)


def accumulate_value(inputs, update):
    for k, v in update.items():
        if k in inputs:
            inputs[k] = inputs[k] + v
        else:
            inputs[k] = v
    return inputs


class DebugLoss:
    """JAX/Pallas port of oobleck.losses.DebugLoss."""

    def __init__(self, input_key: str, output_key: str, weight: float = 1.0):
        self.input_key = input_key
        self.output_key = output_key
        self.weight = weight

    def __call__(self, inputs):
        l1 = _l1_mean(inputs[self.input_key], inputs[self.output_key])
        inputs = accumulate_value(
            inputs, {"generator_loss": l1 * jnp.float32(self.weight)}
        )
        return inputs


if __name__ == "__main__":
    key = jax.random.PRNGKey(0)
    k1, k2, k3 = jax.random.split(key, 3)

    # NCHW-shaped example tensors (batch=2, channels=4, spatial=16x16).
    x = jax.random.normal(k1, (2, 4, 16, 16), dtype=jnp.float32)
    y = jax.random.normal(k2, (2, 4, 16, 16), dtype=jnp.float32)
    prev_gen_loss = jax.random.uniform(k3, (), dtype=jnp.float32)

    inputs = {"audio": x, "recon": y, "generator_loss": prev_gen_loss}

    loss_mod = DebugLoss(input_key="audio", output_key="recon", weight=0.5)
    out = loss_mod(dict(inputs))
    gen_loss = jax.block_until_ready(out["generator_loss"])

    # Reference check (plain JAX) to validate kernel semantics.
    ref = prev_gen_loss + jnp.abs(x - y).mean() * 0.5
    assert jnp.allclose(gen_loss, ref, rtol=1e-5, atol=1e-6), (gen_loss, ref)

    print("KERNEL_OK")
</pallas_src>

<mosaic_0001>
module attributes {stable_mosaic.version = 11 : i64} {
  func.func @kernel(%arg0: i32, %arg1: i32, %arg2: memref<16x128xf32, #tpu.memory_space<vmem>>, %arg3: memref<16x128xf32, #tpu.memory_space<vmem>>, %arg4: memref<1x8x128xf32, #tpu.memory_space<vmem>>, %arg5: memref<8x128xf32, #tpu.memory_space<vmem>>) attributes {dimension_semantics = [#tpu.dimension_semantics<parallel>, #tpu.dimension_semantics<arbitrary>], iteration_bounds = array<i64: 1, 1>, scalar_prefetch = 0 : i64, scratch_operands = 1 : i64, tpu.core_type = #tpu.core_type<tc>, window_params = [{transform_indices = @transform_0, window_bounds = array<i64: 16, 128>}, {transform_indices = @transform_1, window_bounds = array<i64: 16, 128>}, {transform_indices = @transform_2, window_bounds = array<i64: 1, 8, 128>}]} {
    %c0_i32 = arith.constant 0 : i32
    %0 = arith.cmpi eq, %arg1, %c0_i32 : i32
    %1 = arith.extui %0 : i1 to i32
    %c0_i32_0 = arith.constant 0 : i32
    %2 = arith.cmpi ne, %1, %c0_i32_0 : i32
    scf.if %2 {
      %cst_10 = arith.constant 0.000000e+00 : f32
      %15 = vector.broadcast %cst_10 : f32 to vector<8x128xf32>
      %c0_11 = arith.constant 0 : index
      %c0_12 = arith.constant 0 : index
      %16 = vector.load %arg5[%c0_11, %c0_12] : memref<8x128xf32, #tpu.memory_space<vmem>>, vector<8x128xf32>
      tpu.vector_store %arg5[%c0_11, %c0_12], %15 {strides = array<i32>} : memref<8x128xf32, #tpu.memory_space<vmem>>, vector<8x128xf32>,
    } else {
    }
    %c0 = arith.constant 0 : index
    %c0_1 = arith.constant 0 : index
    %3 = vector.load %arg2[%c0, %c0_1] : memref<16x128xf32, #tpu.memory_space<vmem>>, vector<16x128xf32>
    %c0_2 = arith.constant 0 : index
    %c0_3 = arith.constant 0 : index
    %4 = vector.load %arg3[%c0_2, %c0_3] : memref<16x128xf32, #tpu.memory_space<vmem>>, vector<16x128xf32>
    %5 = arith.subf %3, %4 : vector<16x128xf32>
    %6 = math.absf %5 : vector<16x128xf32>
    %c0_4 = arith.constant 0 : index
    %c0_5 = arith.constant 0 : index
    %7 = vector.load %arg5[%c0_4, %c0_5] : memref<8x128xf32, #tpu.memory_space<vmem>>, vector<8x128xf32>
    %8 = vector.shape_cast %6 : vector<16x128xf32> to vector<2x8x128xf32>
    %cst = arith.constant dense<0.000000e+00> : vector<8x128xf32>
    %9 = vector.multi_reduction <add>, %8, %cst [0] : vector<2x8x128xf32> to vector<8x128xf32>
    %10 = arith.addf %7, %9 : vector<8x128xf32>
    %c0_6 = arith.constant 0 : index
    %c0_7 = arith.constant 0 : index
    %11 = vector.load %arg5[%c0_6, %c0_7] : memref<8x128xf32, #tpu.memory_space<vmem>>, vector<8x128xf32>
    tpu.vector_store %arg5[%c0_6, %c0_7], %10 {strides = array<i32>} : memref<8x128xf32, #tpu.memory_space<vmem>>, vector<8x128xf32>,
    %c0_i32_8 = arith.constant 0 : i32
    %12 = arith.cmpi eq, %arg1, %c0_i32_8 : i32
    %13 = arith.extui %12 : i1 to i32
    %c0_i32_9 = arith.constant 0 : i32
    %14 = arith.cmpi ne, %13, %c0_i32_9 : i32
    scf.if %14 {
      %c0_10 = arith.constant 0 : index
      %c0_11 = arith.constant 0 : index
      %15 = vector.load %arg5[%c0_10, %c0_11] : memref<8x128xf32, #tpu.memory_space<vmem>>, vector<8x128xf32>
      %c0_12 = arith.constant 0 : index
      %c0_13 = arith.constant 0 : index
      %c0_14 = arith.constant 0 : index
      %16 = vector.load %arg4[%c0_12, %c0_13, %c0_14] : memref<1x8x128xf32, #tpu.memory_space<vmem>>, vector<1x8x128xf32>
      %17 = vector.shape_cast %16 : vector<1x8x128xf32> to vector<8x128xf32>
      %18 = vector.shape_cast %15 : vector<8x128xf32> to vector<1x8x128xf32>
      tpu.vector_store %arg4[%c0_12, %c0_13, %c0_14], %18 {strides = array<i32>} : memref<1x8x128xf32, #tpu.memory_space<vmem>>, vector<1x8x128xf32>,
    } else {
    }
    return
  }
  func.func @transform_0(%arg0: i32, %arg1: i32) -> (i32, i32) {
    %c0_i32 = arith.constant 0 : i32
    %0 = arith.muli %arg0, %c0_i32 : i32
    %1 = arith.addi %0, %arg1 : i32
    %c0_i32_0 = arith.constant 0 : i32
    %c0_i32_1 = arith.constant 0 : i32
    return %1, %c0_i32_0 : i32, i32
  }
  func.func @transform_1(%arg0: i32, %arg1: i32) -> (i32, i32) {
    %c0_i32 = arith.constant 0 : i32
    %0 = arith.muli %arg0, %c0_i32 : i32
    %1 = arith.addi %0, %arg1 : i32
    %c0_i32_0 = arith.constant 0 : i32
    %c0_i32_1 = arith.constant 0 : i32
    return %1, %c0_i32_0 : i32, i32
  }
  func.func @transform_2(%arg0: i32, %arg1: i32) -> (i32, i32, i32) {
    %c0_i32 = arith.constant 0 : i32
    %c0_i32_0 = arith.constant 0 : i32
    %c0_i32_1 = arith.constant 0 : i32
    return %arg0, %c0_i32, %c0_i32_0 : i32, i32, i32
  }
}

</mosaic_0001>

<llo_original>
// kernel: tpu_custom_call.1
$region0: #{tpu_custom_call.1}
  #allocation0 [shape = 'u32[]', space=smem, size = 0x4, offset = 0x4, fixed_abs, tag = 'smem constant byte address 0x4 - core index']
  #allocation1 [shape = 'u32[72,128]{1,0:T(1,128)}', space=vmem, size = 0x9000, scoped, tag = 'internal scratch']
  #allocation2 [shape = 'f32[8,128]{1,0:T(8,128)}', space=vmem, size = 0x1000, scoped, tag = 'scratch operand']
  %s0 = inlined_call_operand.hbm [shape: f32[16,128], index: 0, kind: input, shape index: {}]
  %s1 = inlined_call_operand.hbm [shape: f32[16,128], index: 1, kind: input, shape index: {}]
  %s2 = inlined_call_operand.hbm [shape: f32[1,8,128], index: 2, kind: output, shape index: {}]
  %s3 = sld [smem:[#allocation0]]
  $region34: #{tpu_custom_call.1} parent=0
    _
  %s5 = ssub.s32 1, %s3
  %s6 = scalar_select 0, %s5, %s3
  $region1: #{tpu_custom_call.1} parent=0
    #allocation3 [shape = 'u8[8192]{0}', space=vmem, size = 0x2000, scoped, tag = 'input window, operand 0, single buffered']
    #allocation4 [shape = 's32[1]{0}', space=sflag, size = 0x4, scoped, tag = 'scoped memory for tpu_custom_call.1']
    #allocation5 [shape = 's32[1]{0}', space=sflag, size = 0x4, scoped, tag = 'scoped memory for tpu_custom_call.1']
    #allocation6 [shape = 'u8[8192]{0}', space=vmem, size = 0x2000, scoped, tag = 'input window, operand 1, single buffered']
    #allocation7 [shape = 's32[1]{0}', space=sflag, size = 0x4, scoped, tag = 'scoped memory for tpu_custom_call.1']
    #allocation8 [shape = 'u8[4096]{0}', space=vmem, size = 0x1000, scoped, tag = 'output window, operand 0, single buffered']
    %7 = vsyncpa [#allocation4], 0
    %8 = vsyncpa [#allocation7], 0
    %9 = vsyncpa [#allocation5], 0
    // Predicated region
    $region2: #{tpu_custom_call.1} parent=1 // pred_check
      _
    $region3: #{tpu_custom_call.1} parent=1 // pred_check_branch
      %11 = sbr.rel (0) target = $region5
    $region4: #{tpu_custom_call.1} parent=1 // pred_region
      %13 = vsyncadd [#allocation4], 0
      %s14 = sshll.u32 %s0, 4
      %s15 = int_to_ptr.hbm [resolvable:$true] %s14
      %s16 = sshll.u32 [#allocation3], 4
      %s17 = int_to_ptr.vmem [resolvable:$true] %s16
      %22 = dma.hbm_to_vmem [thread:$0]  %s15, 256, %s17, [#allocation4], 128, 128, 8
    $region5: #{tpu_custom_call.1} parent=1 // pred_fallthru
      _
    // Predicated region
    $region6: #{tpu_custom_call.1} parent=1 // pred_check
      _
    $region7: #{tpu_custom_call.1} parent=1 // pred_check_branch
      %24 = sbr.rel (0) target = $region9
    $region8: #{tpu_custom_call.1} parent=1 // pred_region
      %26 = vsyncadd [#allocation7], 0
      %s27 = sshll.u32 %s1, 4
      %s28 = int_to_ptr.hbm [resolvable:$true] %s27
      %s29 = sshll.u32 [#allocation6], 4
      %s30 = int_to_ptr.vmem [resolvable:$true] %s29
      %35 = dma.hbm_to_vmem [thread:$0]  %s28, 256, %s30, [#allocation7], 128, 128, 8
    $region9: #{tpu_custom_call.1} parent=1 // pred_fallthru
      _
    // Predicated region
    $region10: #{tpu_custom_call.1} parent=1 // pred_check
      _
    $region11: #{tpu_custom_call.1} parent=1 // pred_check_branch
      %37 = sbr.rel (0) target = $region13
    $region12: #{tpu_custom_call.1} parent=1 // pred_region
      %39 = dma.done [#allocation4], 256
    $region13: #{tpu_custom_call.1} parent=1 // pred_fallthru
      _
    // Predicated region
    $region14: #{tpu_custom_call.1} parent=1 // pred_check
      _
    $region15: #{tpu_custom_call.1} parent=1 // pred_check_branch
      %41 = sbr.rel (0) target = $region17
    $region16: #{tpu_custom_call.1} parent=1 // pred_region
      %43 = dma.done [#allocation7], 256
    $region17: #{tpu_custom_call.1} parent=1 // pred_fallthru
      _
    %p44 = scmp.eq.s32.totalorder 0, 0
    // Predicated region
    $region18: #{tpu_custom_call.1} parent=1 // pred_check
      %p45 = pneg %p44
    $region19: #{tpu_custom_call.1} parent=1 // pred_check_branch
      %47 = sbr.rel (%p45) target = $region21
    $region20: #{tpu_custom_call.1} parent=1 // pred_region
      %48 = vst [vmem:[#allocation2] sm:$0xff] 0.0
    $region21: #{tpu_custom_call.1} parent=1 // pred_fallthru
      _
    %v49 = vld [vmem:[#allocation3] sm:$0xff]
    %v50 = vld [vmem:[#allocation3 + $0x8] sm:$0xff]
    %v51 = vld [vmem:[#allocation6] sm:$0xff]
    %v52 = vld [vmem:[#allocation6 + $0x8] sm:$0xff]
    %v53 = vsub.f32 %v49, %v51
    %v54 = vsub.f32 %v50, %v52
    %v55 = vand.u32 2147483647, %v53
    %v56 = vand.u32 2147483647, %v54
    %v57 = vld [vmem:[#allocation2] sm:$0xff]
    %v58 = vadd.f32 %v55, %v56
    %v59 = vadd.f32 %v57, %v58
    %60 = vst [vmem:[#allocation2] sm:$0xff] %v59
    // Predicated region
    $region22: #{tpu_custom_call.1} parent=1 // pred_check
      %p61 = pneg %p44
    $region23: #{tpu_custom_call.1} parent=1 // pred_check_branch
      %63 = sbr.rel (%p61) target = $region25
    $region24: #{tpu_custom_call.1} parent=1 // pred_region
      %v64 = vld [vmem:[#allocation2] sm:$0xff]
      %65 = vst [vmem:[#allocation8] sm:$0xff] %v64
    $region25: #{tpu_custom_call.1} parent=1 // pred_fallthru
      _
    // Predicated region
    $region26: #{tpu_custom_call.1} parent=1 // pred_check
      _
    $region27: #{tpu_custom_call.1} parent=1 // pred_check_branch
      %67 = sbr.rel (0) target = $region29
    $region28: #{tpu_custom_call.1} parent=1 // pred_region
      %69 = vsyncadd [#allocation5], 0
      %s71 = sshll.u32 [#allocation8], 4
      %s72 = int_to_ptr.vmem [resolvable:$true] %s71
      %s73 = sshll.u32 %s2, 4
      %s74 = int_to_ptr.hbm [resolvable:$true] %s73
      %76 = dma.vmem_to_hbm [thread:$0]  %s72, 128, %s74, [#allocation5]
    $region29: #{tpu_custom_call.1} parent=1 // pred_fallthru
      _
    // Predicated region
    $region30: #{tpu_custom_call.1} parent=1 // pred_check
      _
    $region31: #{tpu_custom_call.1} parent=1 // pred_check_branch
      %78 = sbr.rel (0) target = $region33
    $region32: #{tpu_custom_call.1} parent=1 // pred_region
      %80 = dma.done [#allocation5], 128
    $region33: #{tpu_custom_call.1} parent=1 // pred_fallthru
      _
    %81 = vsyncpa [#allocation4], 1
    %82 = vsyncpa [#allocation7], 1
    %83 = vsyncpa [#allocation5], 1

</llo_original>
